<compile_context>
chip_gen: v6e
topology: v6e:2x2x1
jax: 0.10.0
libtpu: 0.0.40
codegen_flags: <defaults>
</compile_context>

<pallas_src>
import functools
import math

import jax
import jax.numpy as jnp
from jax.experimental import pallas as pl
from jax.experimental.pallas import tpu as pltpu

_EPS = 1e-07
_LOG_EPS = math.log(_EPS)
_LOG_1M_EPS = math.log(1.0 - _EPS)


def _wbce_kernel(yp_ref, yt_ref, w_ref, out_ref, colsum_ref, *,
                 from_logits, binary_labels, valid_rows, block_b, chunk_b,
                 n_chunks, need_mask):
    """One batch tile -> one weighted-BCE partial sum (independent per step)."""
    tile_row0 = pl.program_id(0) * block_b

    def _tile(mask_rows):
        colsum_ref[...] = jnp.zeros_like(colsum_ref)

        def body(c, carry):
            r0 = pl.multiple_of(c * chunk_b, chunk_b)
            yp = yp_ref[pl.ds(r0, chunk_b), :].astype(jnp.float32)
            yt = yt_ref[pl.ds(r0, chunk_b), :].astype(jnp.float32)

            if from_logits:
                # log-softmax identity: only exp + log(1-p) are per-element
                # EUP ops; log(s) / the divide are per-row.  Clamp applied in
                # log space is exactly log(clamp(p, eps, 1-eps)).
                m = jnp.max(yp, axis=-1, keepdims=True)
                e = jnp.exp(yp - m)
                s = jnp.sum(e, axis=-1, keepdims=True)
                log_p = jnp.clip(yp - (m + jnp.log(s)), _LOG_EPS, _LOG_1M_EPS)
                p = jnp.clip(e / s, _EPS, 1.0 - _EPS)
                if binary_labels:
                    bce = -jnp.where(yt >= 0.5, log_p, jnp.log(1.0 - p))
                else:
                    bce = -(yt * log_p + (1.0 - yt) * jnp.log(1.0 - p))
            else:
                p = jnp.clip(yp, _EPS, 1.0 - _EPS)
                if binary_labels:
                    # hard {0,1} labels: a single EUP log per element
                    bce = -jnp.log(jnp.where(yt >= 0.5, p, 1.0 - p))
                else:
                    bce = -(yt * jnp.log(p) + (1.0 - yt) * jnp.log(1.0 - p))

            if mask_rows:
                # SELECT (not multiply) so NaN/Inf garbage in OOB rows is dropped.
                rows = tile_row0 + r0 + jax.lax.broadcasted_iota(
                    jnp.int32, (chunk_b, 1), 0)
                bce = jnp.where(rows < valid_rows, bce, 0.0)

            colsum_ref[...] += jnp.sum(bce, axis=0, keepdims=True)
            return carry

        jax.lax.fori_loop(0, n_chunks, body, 0, unroll=(n_chunks <= 4))

        # weight multiply hoisted out of the per-element hot path:
        # one (1, N) multiply-reduce per tile.
        partial = jnp.sum(w_ref[...] * colsum_ref[...])
        out_ref[...] = partial.reshape(1, 1, 1)

    if need_mask:
        last = pl.program_id(0) == pl.num_programs(0) - 1

        @pl.when(last)
        def _():
            _tile(True)

        @pl.when(jnp.logical_not(last))
        def _():
            _tile(False)
    else:
        _tile(False)


def _round_up(x, m):
    return (x + m - 1) // m * m


def weighted_variance_bce(y_pred, y_true, weights=None, conditional_info=None,
                          from_logits=False, binary_labels=False, block_b=None):
    """JAX/Pallas equivalent of WeightedVarianceBCE.forward.

    `binary_labels=True` is an opt-in fast path valid only when y_true is hard
    {0,1}; default semantics (soft labels allowed) match the torch module.
    """
    B, N = y_pred.shape
    total_count = B * N

    # --- weights4batch: python dict lookup -> per-point weight vector (len N) ---
    if weights:
        keys = {int(k) for k in weights}
        n_keys = max(keys) + 1
        table = jnp.array([float(weights.get(k, 0.0)) for k in range(n_keys)],
                          jnp.float32)
        missing = None
        try:  # replicate torch's KeyError when conditional_info is concrete
            ci_host = jax.device_get(conditional_info)
            missing = sorted(set(int(v) for v in ci_host.reshape(-1).tolist())
                             - keys)
        except Exception:
            # TODO(synk): traced conditional_info cannot reproduce torch's
            # KeyError; missing keys map to weight 0.0 in that case.
            missing = None
        if missing:
            raise KeyError(missing[0])
        w = table[conditional_info].astype(jnp.float32)        # (N,)
    else:
        w = jnp.ones((N,), jnp.float32)                        # unweighted path

    # --- lane-density fold: probabilities-in with a non-128-multiple last dim
    # -> fold batch rows into lanes so every 128-lane vreg is dense.  Skipped
    # for from_logits, where softmax needs the true last dim per row.
    if (not from_logits) and N % 128 != 0:
        f = math.lcm(N, 128) // N
        if f > 1 and B % f == 0:
            B, N = B // f, N * f
            y_pred = y_pred.reshape(B, N)
            y_true = y_true.reshape(B, N)
            w = jnp.tile(w, f)                                 # w_new[j] = w_old[j % N_old]
    w = w.reshape(1, N)

    # --- sublane pack of the narrowest streamed dtype (8 f32 / 16 bf16 / 32 i8)
    itemsize_p = jnp.dtype(y_pred.dtype).itemsize
    itemsize_t = jnp.dtype(y_true.dtype).itemsize
    in_itemsize = itemsize_p + itemsize_t
    pack = max(32 // itemsize_p, 32 // itemsize_t, 8)

    # --- VMEM capacity -> per-tile DMA budget (v7x has only 64 MiB VMEM)
    try:
        vmem_cap = int(pltpu.get_tpu_info().vmem_capacity_bytes)
    except Exception:
        vmem_cap = 64 << 20
    budget = (4 << 20) if vmem_cap >= (100 << 20) else (2 << 20)

    # --- compute sub-chunk: bounds the f32 working set independently of the
    # DMA tile (~128K elements -> ~0.5 MiB per f32 temporary).
    chunk_b = min((128 * 1024) // max(N, 1), 512)
    chunk_b = max(pack, chunk_b // pack * pack)
    chunk_b = min(chunk_b, _round_up(B, pack))

    # --- DMA tile: biggest multiple of chunk_b inside the budget.
    if block_b is None:
        block_b = max(chunk_b, (budget // (N * in_itemsize)) // chunk_b * chunk_b)
    else:
        block_b = max(chunk_b, block_b // chunk_b * chunk_b)
    block_b = min(block_b, _round_up(B, chunk_b))
    n_chunks = block_b // chunk_b

    # --- no padding: cdiv grid, last block overhangs and is masked in-kernel.
    grid = (pl.cdiv(B, block_b),)
    need_mask = (B % block_b) != 0

    # double-buffered inputs + chunk-sized f32 temporaries + weights + headroom
    vmem_needed = (2 * block_b * N * in_itemsize
                   + 8 * chunk_b * N * 4
                   + 2 * N * 4 + (1 << 20))
    vmem_limit = max(vmem_needed, 32 << 20)
    vmem_limit = min(vmem_limit, int(0.75 * vmem_cap))
    vmem_limit = int(max(vmem_limit, vmem_needed))

    n_transc = (3 if from_logits else 2) * B * N
    cost = pl.CostEstimate(flops=10 * B * N,
                           transcendentals=n_transc,
                           bytes_accessed=B * N * in_itemsize + N * 4 + grid[0] * 4)

    kernel = functools.partial(
        _wbce_kernel, from_logits=from_logits, binary_labels=binary_labels,
        valid_rows=B, block_b=block_b, chunk_b=chunk_b, n_chunks=n_chunks,
        need_mask=need_mask)

    partials = pl.pallas_call(
        kernel,
        out_shape=jax.ShapeDtypeStruct((grid[0], 1, 1), jnp.float32),
        grid_spec=pltpu.PrefetchScalarGridSpec(
            num_scalar_prefetch=0,
            grid=grid,
            in_specs=[
                pl.BlockSpec((block_b, N), lambda i: (i, 0)),   # y_pred tile
                pl.BlockSpec((block_b, N), lambda i: (i, 0)),   # y_true tile
                pl.BlockSpec((1, N), lambda i: (0, 0)),         # weights (resident)
            ],
            out_specs=pl.BlockSpec((1, 1, 1), lambda i: (i, 0, 0)),
            scratch_shapes=[pltpu.VMEM((1, N), jnp.float32)],   # colsum accumulator
        ),
        compiler_params=pltpu.CompilerParams(
            dimension_semantics=("parallel",),   # independent tiles; v7x: 2 TCs
            vmem_limit_bytes=vmem_limit),
        cost_estimate=cost,
    )(y_pred, y_true, w)

    # tiny final reduction over per-tile partials; 'mean' divides by B*N elements
    return jnp.sum(partials) / jnp.float32(total_count)


def _ref_loss(y_pred, y_true, w, from_logits):
    yp = y_pred.astype(jnp.float32)
    yt = y_true.astype(jnp.float32)
    if from_logits:
        yp = jax.nn.softmax(yp, axis=-1)
    p = jnp.clip(yp, _EPS, 1.0 - _EPS)
    bce = -(yt * jnp.log(p) + (1.0 - yt) * jnp.log(1.0 - p))
    return jnp.mean(w * bce)


if __name__ == "__main__":
    key = jax.random.PRNGKey(0)
    k1, k2, k3, k4, k5, k6 = jax.random.split(key, 6)

    # ---- test 1: weighted, probabilities-in (small last dim -> lane fold) ----
    B, N = 16, 16
    y_pred = jax.random.uniform(k1, (B, N), jnp.float32, 0.01, 0.99)
    y_true = (jax.random.uniform(k2, (B, N)) > 0.5).astype(jnp.float32)
    conditional_info = jax.random.randint(k3, (N,), 0, 4)      # sine x-coord bins
    weights = {0: 0.5, 1: 1.0, 2: 1.5, 3: 2.0}

    loss = jax.block_until_ready(
        weighted_variance_bce(y_pred, y_true, weights, conditional_info,
                              from_logits=False))
    table = jnp.array([weights[k] for k in range(4)], jnp.float32)
    w_vec = table[conditional_info]
    ref = _ref_loss(y_pred, y_true, w_vec, from_logits=False)
    assert jnp.allclose(loss, ref, atol=1e-5, rtol=1e-5), (loss, ref)

    # ---- test 2: unweighted, from_logits=True (log-softmax path) ----
    logits = jax.random.normal(k1, (B, N), jnp.float32)
    loss2 = jax.block_until_ready(
        weighted_variance_bce(logits, y_true, None, None, from_logits=True))
    ref2 = _ref_loss(logits, y_true, jnp.ones((N,), jnp.float32), from_logits=True)
    assert jnp.allclose(loss2, ref2, atol=1e-5, rtol=1e-5), (loss2, ref2)

    # ---- test 3: opt-in binary_labels fast path (hard labels -> same result) ----
    loss3 = jax.block_until_ready(
        weighted_variance_bce(y_pred, y_true, weights, conditional_info,
                              from_logits=False, binary_labels=True))
    assert jnp.allclose(loss3, ref, atol=1e-5, rtol=1e-5), (loss3, ref)

    # ---- test 4: bf16 streaming, ragged batch (no pad, masked last block) ----
    B2, N2 = 300, 256
    yp_b = jax.random.uniform(k4, (B2, N2), jnp.float32, 0.01, 0.99).astype(jnp.bfloat16)
    yt_b = (jax.random.uniform(k5, (B2, N2)) > 0.5).astype(jnp.bfloat16)
    ci2 = jax.random.randint(k6, (N2,), 0, 4)
    loss4 = jax.block_until_ready(
        weighted_variance_bce(yp_b, yt_b, weights, ci2, from_logits=False))
    w2 = table[ci2]
    ref4 = _ref_loss(yp_b, yt_b, w2, from_logits=False)
    assert jnp.allclose(loss4, ref4, atol=1e-4, rtol=1e-4), (loss4, ref4)

    print("KERNEL_OK")
</pallas_src>

<mosaic_0001>
module attributes {stable_mosaic.version = 11 : i64} {
  func.func @_wbce_kernel(%arg0: i32, %arg1: memref<8x128xf32, #tpu.memory_space<vmem>>, %arg2: memref<8x128xf32, #tpu.memory_space<vmem>>, %arg3: memref<1x128xf32, #tpu.memory_space<vmem>>, %arg4: memref<1x1x1xf32, #tpu.memory_space<vmem>>, %arg5: memref<1x128xf32, #tpu.memory_space<vmem>>) attributes {dimension_semantics = [#tpu.dimension_semantics<parallel>], iteration_bounds = array<i64: 1>, scalar_prefetch = 0 : i64, scratch_operands = 1 : i64, tpu.core_type = #tpu.core_type<tc>, window_params = [{transform_indices = @transform_0, window_bounds = array<i64: 8, 128>}, {transform_indices = @transform_1, window_bounds = array<i64: 8, 128>}, {pipeline_mode = #tpu.pipeline_mode<synchronous>, transform_indices = @transform_2, window_bounds = array<i64: 1, 128>}, {transform_indices = @transform_3, window_bounds = array<i64: 1, 1, 1>}]} {
    %c8_i32 = arith.constant 8 : i32
    %0 = arith.muli %arg0, %c8_i32 : i32
    %c0_i32 = arith.constant 0 : i32
    %1 = arith.cmpi eq, %arg0, %c0_i32 : i32
    %2 = arith.extui %1 : i1 to i32
    %c0_i32_0 = arith.constant 0 : i32
    %3 = arith.cmpi ne, %2, %c0_i32_0 : i32
    scf.if %3 {
      %cst = arith.constant 0.000000e+00 : f32
      %7 = vector.broadcast %cst : f32 to vector<1x128xf32>
      %c0 = arith.constant 0 : index
      %c0_2 = arith.constant 0 : index
      %8 = vector.load %arg5[%c0, %c0_2] : memref<1x128xf32, #tpu.memory_space<vmem>>, vector<1x128xf32>
      tpu.vector_store %arg5[%c0, %c0_2], %7 {strides = array<i32>} : memref<1x128xf32, #tpu.memory_space<vmem>>, vector<1x128xf32>,
      %c0_i32_3 = arith.constant 0 : i32
      %c8_i32_4 = arith.constant 8 : i32
      %9 = arith.muli %c0_i32_3, %c8_i32_4 : i32
      %10 = tpu.assume_multiple %9, 8 : i32
      %11 = arith.index_cast %10 : i32 to index
      %c0_5 = arith.constant 0 : index
      %12 = vector.load %arg1[%11, %c0_5] : memref<8x128xf32, #tpu.memory_space<vmem>>, vector<8x128xf32>
      %13 = arith.index_cast %10 : i32 to index
      %c0_6 = arith.constant 0 : index
      %14 = vector.load %arg2[%13, %c0_6] : memref<8x128xf32, #tpu.memory_space<vmem>>, vector<8x128xf32>
      %cst_7 = arith.constant 1.000000e-07 : f32
      %cst_8 = arith.constant 0.99999988 : f32
      %15 = vector.broadcast %cst_7 : f32 to vector<8x128xf32>
      %16 = arith.maximumf %15, %12 : vector<8x128xf32>
      %17 = vector.broadcast %cst_8 : f32 to vector<8x128xf32>
      %18 = arith.minimumf %17, %16 : vector<8x128xf32>
      %19 = math.log %18 : vector<8x128xf32>
      %20 = arith.mulf %14, %19 : vector<8x128xf32>
      %cst_9 = arith.constant 1.000000e+00 : f32
      %21 = vector.broadcast %cst_9 : f32 to vector<8x128xf32>
      %22 = arith.subf %21, %14 : vector<8x128xf32>
      %cst_10 = arith.constant 1.000000e+00 : f32
      %23 = vector.broadcast %cst_10 : f32 to vector<8x128xf32>
      %24 = arith.subf %23, %18 : vector<8x128xf32>
      %25 = math.log %24 : vector<8x128xf32>
      %26 = arith.mulf %22, %25 : vector<8x128xf32>
      %27 = arith.addf %20, %26 : vector<8x128xf32>
      %cst_11 = arith.constant 0.000000e+00 : f32
      %28 = vector.broadcast %cst_11 : f32 to vector<8x128xf32>
      %29 = arith.subf %28, %27 : vector<8x128xf32>
      %30 = arith.addi %0, %10 : i32
      %31 = tpu.iota {dimensions = array<i32: 0>} : vector<8x1xi32>
      %32 = vector.broadcast %30 : i32 to vector<8x1xi32>
      %33 = arith.addi %32, %31 : vector<8x1xi32>
      %c2_i32 = arith.constant 2 : i32
      %34 = vector.broadcast %c2_i32 : i32 to vector<8x1xi32>
      %35 = arith.cmpi slt, %33, %34 : vector<8x1xi32>
      %cst_12 = arith.constant 0.000000e+00 : f32
      %36 = vector.shape_cast %35 : vector<8x1xi1> to vector<8x1xi1>
      %37 = vector.broadcast %36 : vector<8x1xi1> to vector<8x128xi1>
      %38 = vector.broadcast %cst_12 : f32 to vector<8x128xf32>
      %39 = arith.select %37, %29, %38 : vector<8x128xi1>, vector<8x128xf32>
      %c0_13 = arith.constant 0 : index
      %c0_14 = arith.constant 0 : index
      %40 = vector.load %arg5[%c0_13, %c0_14] : memref<1x128xf32, #tpu.memory_space<vmem>>, vector<1x128xf32>
      %cst_15 = arith.constant dense<0.000000e+00> : vector<128xf32>
      %41 = vector.multi_reduction <add>, %39, %cst_15 [0] : vector<8x128xf32> to vector<128xf32>
      %42 = vector.shape_cast %41 : vector<128xf32> to vector<1x128xf32>
      %43 = arith.addf %40, %42 : vector<1x128xf32>
      %c0_16 = arith.constant 0 : index
      %c0_17 = arith.constant 0 : index
      %44 = vector.load %arg5[%c0_16, %c0_17] : memref<1x128xf32, #tpu.memory_space<vmem>>, vector<1x128xf32>
      tpu.vector_store %arg5[%c0_16, %c0_17], %43 {strides = array<i32>} : memref<1x128xf32, #tpu.memory_space<vmem>>, vector<1x128xf32>,
      %c1_i32 = arith.constant 1 : i32
      %c0_18 = arith.constant 0 : index
      %c0_19 = arith.constant 0 : index
      %45 = vector.load %arg3[%c0_18, %c0_19] : memref<1x128xf32, #tpu.memory_space<vmem>>, vector<1x128xf32>
      %c0_20 = arith.constant 0 : index
      %c0_21 = arith.constant 0 : index
      %46 = vector.load %arg5[%c0_20, %c0_21] : memref<1x128xf32, #tpu.memory_space<vmem>>, vector<1x128xf32>
      %47 = arith.mulf %45, %46 : vector<1x128xf32>
      %48 = vector.shape_cast %47 : vector<1x128xf32> to vector<1x1x128xf32>
      %cst_22 = arith.constant dense<0.000000e+00> : vector<1xf32>
      %49 = vector.multi_reduction <add>, %48, %cst_22 [1, 2] : vector<1x1x128xf32> to vector<1xf32>
      %50 = vector.shape_cast %49 : vector<1xf32> to vector<1x1x1xf32>
      %51 = vector.extract %50[0, 0, 0] : f32 from vector<1x1x1xf32>
      %52 = vector.broadcast %51 : f32 to vector<1x1x1xf32>
      %c0_23 = arith.constant 0 : index
      %c0_24 = arith.constant 0 : index
      %c0_25 = arith.constant 0 : index
      %53 = vector.load %arg4[%c0_23, %c0_24, %c0_25] : memref<1x1x1xf32, #tpu.memory_space<vmem>>, vector<1x1x1xf32>
      tpu.vector_store %arg4[%c0_23, %c0_24, %c0_25], %52 {strides = array<i32>} : memref<1x1x1xf32, #tpu.memory_space<vmem>>, vector<1x1x1xf32>,
    } else {
    }
    %true = arith.constant true
    %4 = arith.xori %1, %true : i1
    %5 = arith.extui %4 : i1 to i32
    %c0_i32_1 = arith.constant 0 : i32
    %6 = arith.cmpi ne, %5, %c0_i32_1 : i32
    scf.if %6 {
      %cst = arith.constant 0.000000e+00 : f32
      %7 = vector.broadcast %cst : f32 to vector<1x128xf32>
      %c0 = arith.constant 0 : index
      %c0_2 = arith.constant 0 : index
      %8 = vector.load %arg5[%c0, %c0_2] : memref<1x128xf32, #tpu.memory_space<vmem>>, vector<1x128xf32>
      tpu.vector_store %arg5[%c0, %c0_2], %7 {strides = array<i32>} : memref<1x128xf32, #tpu.memory_space<vmem>>, vector<1x128xf32>,
      %c0_i32_3 = arith.constant 0 : i32
      %c8_i32_4 = arith.constant 8 : i32
      %9 = arith.muli %c0_i32_3, %c8_i32_4 : i32
      %10 = tpu.assume_multiple %9, 8 : i32
      %11 = arith.index_cast %10 : i32 to index
      %c0_5 = arith.constant 0 : index
      %12 = vector.load %arg1[%11, %c0_5] : memref<8x128xf32, #tpu.memory_space<vmem>>, vector<8x128xf32>
      %13 = arith.index_cast %10 : i32 to index
      %c0_6 = arith.constant 0 : index
      %14 = vector.load %arg2[%13, %c0_6] : memref<8x128xf32, #tpu.memory_space<vmem>>, vector<8x128xf32>
      %cst_7 = arith.constant 1.000000e-07 : f32
      %cst_8 = arith.constant 0.99999988 : f32
      %15 = vector.broadcast %cst_7 : f32 to vector<8x128xf32>
      %16 = arith.maximumf %15, %12 : vector<8x128xf32>
      %17 = vector.broadcast %cst_8 : f32 to vector<8x128xf32>
      %18 = arith.minimumf %17, %16 : vector<8x128xf32>
      %19 = math.log %18 : vector<8x128xf32>
      %20 = arith.mulf %14, %19 : vector<8x128xf32>
      %cst_9 = arith.constant 1.000000e+00 : f32
      %21 = vector.broadcast %cst_9 : f32 to vector<8x128xf32>
      %22 = arith.subf %21, %14 : vector<8x128xf32>
      %cst_10 = arith.constant 1.000000e+00 : f32
      %23 = vector.broadcast %cst_10 : f32 to vector<8x128xf32>
      %24 = arith.subf %23, %18 : vector<8x128xf32>
      %25 = math.log %24 : vector<8x128xf32>
      %26 = arith.mulf %22, %25 : vector<8x128xf32>
      %27 = arith.addf %20, %26 : vector<8x128xf32>
      %cst_11 = arith.constant 0.000000e+00 : f32
      %28 = vector.broadcast %cst_11 : f32 to vector<8x128xf32>
      %29 = arith.subf %28, %27 : vector<8x128xf32>
      %c0_12 = arith.constant 0 : index
      %c0_13 = arith.constant 0 : index
      %30 = vector.load %arg5[%c0_12, %c0_13] : memref<1x128xf32, #tpu.memory_space<vmem>>, vector<1x128xf32>
      %cst_14 = arith.constant dense<0.000000e+00> : vector<128xf32>
      %31 = vector.multi_reduction <add>, %29, %cst_14 [0] : vector<8x128xf32> to vector<128xf32>
      %32 = vector.shape_cast %31 : vector<128xf32> to vector<1x128xf32>
      %33 = arith.addf %30, %32 : vector<1x128xf32>
      %c0_15 = arith.constant 0 : index
      %c0_16 = arith.constant 0 : index
      %34 = vector.load %arg5[%c0_15, %c0_16] : memref<1x128xf32, #tpu.memory_space<vmem>>, vector<1x128xf32>
      tpu.vector_store %arg5[%c0_15, %c0_16], %33 {strides = array<i32>} : memref<1x128xf32, #tpu.memory_space<vmem>>, vector<1x128xf32>,
      %c1_i32 = arith.constant 1 : i32
      %c0_17 = arith.constant 0 : index
      %c0_18 = arith.constant 0 : index
      %35 = vector.load %arg3[%c0_17, %c0_18] : memref<1x128xf32, #tpu.memory_space<vmem>>, vector<1x128xf32>
      %c0_19 = arith.constant 0 : index
      %c0_20 = arith.constant 0 : index
      %36 = vector.load %arg5[%c0_19, %c0_20] : memref<1x128xf32, #tpu.memory_space<vmem>>, vector<1x128xf32>
      %37 = arith.mulf %35, %36 : vector<1x128xf32>
      %38 = vector.shape_cast %37 : vector<1x128xf32> to vector<1x1x128xf32>
      %cst_21 = arith.constant dense<0.000000e+00> : vector<1xf32>
      %39 = vector.multi_reduction <add>, %38, %cst_21 [1, 2] : vector<1x1x128xf32> to vector<1xf32>
      %40 = vector.shape_cast %39 : vector<1xf32> to vector<1x1x1xf32>
      %41 = vector.extract %40[0, 0, 0] : f32 from vector<1x1x1xf32>
      %42 = vector.broadcast %41 : f32 to vector<1x1x1xf32>
      %c0_22 = arith.constant 0 : index
      %c0_23 = arith.constant 0 : index
      %c0_24 = arith.constant 0 : index
      %43 = vector.load %arg4[%c0_22, %c0_23, %c0_24] : memref<1x1x1xf32, #tpu.memory_space<vmem>>, vector<1x1x1xf32>
      tpu.vector_store %arg4[%c0_22, %c0_23, %c0_24], %42 {strides = array<i32>} : memref<1x1x1xf32, #tpu.memory_space<vmem>>, vector<1x1x1xf32>,
    } else {
    }
    return
  }
  func.func @transform_0(%arg0: i32) -> (i32, i32) {
    %c0_i32 = arith.constant 0 : i32
    %c0_i32_0 = arith.constant 0 : i32
    return %arg0, %c0_i32 : i32, i32
  }
  func.func @transform_1(%arg0: i32) -> (i32, i32) {
    %c0_i32 = arith.constant 0 : i32
    %c0_i32_0 = arith.constant 0 : i32
    return %arg0, %c0_i32 : i32, i32
  }
  func.func @transform_2(%arg0: i32) -> (i32, i32) {
    %c0_i32 = arith.constant 0 : i32
    %c0_i32_0 = arith.constant 0 : i32
    %c0_i32_1 = arith.constant 0 : i32
    return %c0_i32, %c0_i32_0 : i32, i32
  }
  func.func @transform_3(%arg0: i32) -> (i32, i32, i32) {
    %c0_i32 = arith.constant 0 : i32
    %c0_i32_0 = arith.constant 0 : i32
    %c0_i32_1 = arith.constant 0 : i32
    return %arg0, %c0_i32, %c0_i32_0 : i32, i32, i32
  }
}

</mosaic_0001>

<llo_original>
// kernel: tpu_custom_call.1
$region0: #{tpu_custom_call.1}
  #allocation0 [shape = 'u32[]', space=smem, size = 0x4, offset = 0x4, fixed_abs, tag = 'smem constant byte address 0x4 - core index']
  #allocation1 [shape = 'u32[144,128]{1,0:T(1,128)}', space=vmem, size = 0x12000, scoped, tag = 'internal scratch']
  #allocation2 [shape = 'f32[1,128]{1,0:T(1,128)}', space=vmem, size = 0x200, scoped, tag = 'scratch operand']
  %s0 = inlined_call_operand.hbm [shape: f32[2,128], index: 0, kind: input, shape index: {}]
  %s1 = inlined_call_operand.hbm [shape: f32[2,128], index: 1, kind: input, shape index: {}]
  %s2 = inlined_call_operand.vmem [shape: f32[1,128], index: 2, kind: input, shape index: {}]
  %s3 = inlined_call_operand.hbm [shape: f32[1,1,1], index: 3, kind: output, shape index: {}]
  %s4 = sld [smem:[#allocation0]]
  $region38: #{tpu_custom_call.1} parent=0
    _
  %s6 = ssub.s32 1, %s4
  %s7 = scalar_select 0, %s6, %s4
  $region1: #{tpu_custom_call.1} parent=0
    #allocation3 [shape = 'u8[4096]{0}', space=vmem, size = 0x1000, scoped, tag = 'input window, operand 0, single buffered']
    #allocation4 [shape = 's32[1]{0}', space=sflag, size = 0x4, scoped, tag = 'scoped memory for tpu_custom_call.1']
    #allocation5 [shape = 's32[1]{0}', space=sflag, size = 0x4, scoped, tag = 'scoped memory for tpu_custom_call.1']
    #allocation6 [shape = 'u8[4096]{0}', space=vmem, size = 0x1000, scoped, tag = 'input window, operand 1, single buffered']
    #allocation7 [shape = 's32[1]{0}', space=sflag, size = 0x4, scoped, tag = 'scoped memory for tpu_custom_call.1']
    #allocation8 [shape = 'u8[512]{0}', space=vmem, size = 0x400, scoped, tag = 'output window, operand 0, single buffered']
    %8 = vsyncpa [#allocation4], 0
    %9 = vsyncpa [#allocation7], 0
    %10 = vsyncpa [#allocation5], 0
    // Predicated region
    $region2: #{tpu_custom_call.1} parent=1 // pred_check
      _
    $region3: #{tpu_custom_call.1} parent=1 // pred_check_branch
      %12 = sbr.rel (0) target = $region5
    $region4: #{tpu_custom_call.1} parent=1 // pred_region
      %s14 = ssub.s32 128, 32
      %15 = vsyncadd [#allocation4], %s14
      %s16 = sshll.u32 [#allocation3], 4
      %s17 = int_to_ptr.vmem [resolvable:$true] %s16
      %22 = dma.hbm_to_vmem [thread:$0]  %s0, 32, %s17, [#allocation4], 32, 32, 2
    $region5: #{tpu_custom_call.1} parent=1 // pred_fallthru
      _
    // Predicated region
    $region6: #{tpu_custom_call.1} parent=1 // pred_check
      _
    $region7: #{tpu_custom_call.1} parent=1 // pred_check_branch
      %24 = sbr.rel (0) target = $region9
    $region8: #{tpu_custom_call.1} parent=1 // pred_region
      %s26 = ssub.s32 128, 32
      %27 = vsyncadd [#allocation7], %s26
      %s28 = sshll.u32 [#allocation6], 4
      %s29 = int_to_ptr.vmem [resolvable:$true] %s28
      %34 = dma.hbm_to_vmem [thread:$0]  %s1, 32, %s29, [#allocation7], 32, 32, 2
    $region9: #{tpu_custom_call.1} parent=1 // pred_fallthru
      _
    // Predicated region
    $region10: #{tpu_custom_call.1} parent=1 // pred_check
      _
    $region11: #{tpu_custom_call.1} parent=1 // pred_check_branch
      %36 = sbr.rel (0) target = $region13
    $region12: #{tpu_custom_call.1} parent=1 // pred_region
      _
    $region13: #{tpu_custom_call.1} parent=1 // pred_fallthru
      _
    // Predicated region
    $region14: #{tpu_custom_call.1} parent=1 // pred_check
      _
    $region15: #{tpu_custom_call.1} parent=1 // pred_check_branch
      %38 = sbr.rel (0) target = $region17
    $region16: #{tpu_custom_call.1} parent=1 // pred_region
      %39 = dma.done [#allocation4], 128
    $region17: #{tpu_custom_call.1} parent=1 // pred_fallthru
      _
    // Predicated region
    $region18: #{tpu_custom_call.1} parent=1 // pred_check
      _
    $region19: #{tpu_custom_call.1} parent=1 // pred_check_branch
      %41 = sbr.rel (0) target = $region21
    $region20: #{tpu_custom_call.1} parent=1 // pred_region
      %42 = dma.done [#allocation7], 128
    $region21: #{tpu_custom_call.1} parent=1 // pred_fallthru
      _
    %s43 = smul.u32 0, 8
    %p44 = scmp.eq.s32.totalorder 0, 0
    // Predicated region
    $region22: #{tpu_custom_call.1} parent=1 // pred_check
      %p45 = pneg %p44
    $region23: #{tpu_custom_call.1} parent=1 // pred_check_branch
      %47 = sbr.rel (%p45) target = $region25
    $region24: #{tpu_custom_call.1} parent=1 // pred_region
      %48 = vst [vmem:[#allocation2] sm:$0x1] 0.0
      %v49 = vld [vmem:[#allocation3] sm:$0xff]
      %v50 = vld [vmem:[#allocation6] sm:$0xff]
      %v51 = vmax.f32 %v49, 1e-07
      %v52 = vmin.f32 %v51, 0.9999999
      %v53 = vlog2.pop %v52
      %v54 = vmul.f32 %v53, 0.6931472
      %v55 = vmul.f32 %v50, %v54
      %v56 = vsub.f32 1.0, %v50
      %v57 = vsub.f32 1.0, %v52
      %v58 = vlog2.pop %v57
      %v59 = vmul.f32 %v58, 0.6931472
      %v60 = vmul.f32 %v56, %v59
      %v61 = vadd.f32 %v55, %v60
      %v62 = vsub.f32 0.0, %v61
      %s63 = sadd.s32 %s43, 0
      %v64 = vlaneseq
      %v65 = vshrl.u32 %v64, 7
      %v66 = vstv %s63
      %v67 = vadd.s32 %v66, %v65
      %vm68 = vcmp.lt.s32.totalorder %v67, 2
      %v69 = vsel %vm68, 1, 0
      %vm70 = vcmp.eq.s32.totalorder %v69, 1
      %v71 = vsel %vm70, %v62, 0.0
      %v72 = vld [vmem:[#allocation2] sm:$0x1]
      %v73 = vrot.slane %v71, 4
      %v74 = vadd.f32 %v71, %v73
      %v75 = vrot.slane %v74, 2
      %v76 = vadd.f32 %v74, %v75
      %v77 = vrot.slane %v76, 1
      %v78 = vadd.f32 %v76, %v77
      %v79 = vadd.f32 %v72, %v78
      %80 = vst [vmem:[#allocation2] sm:$0x1] %v79
      %v81 = vld [vmem:[%s2] sm:$0x1]
      %v82 = vld [vmem:[#allocation2] sm:$0x1]
      %v83 = vmul.f32 %v81, %v82
      %vm84 = vcmask 1040384
      %v85 = vsel %vm84, %v83, 0.0
      %86 = vadd.xlane.f32.xlu0 %v85
      %v87 = vpop.xlane.xlu0 %86
      %v88 = vrot.slane %v87, 4
      %v89 = vadd.f32 %v87, %v88
      %v90 = vrot.slane %v89, 2
      %v91 = vadd.f32 %v89, %v90
      %v92 = vrot.slane %v91, 1
      %v93 = vadd.f32 %v91, %v92
      %s94 = vtos %v93
      %v95 = vstv %s94
      %vm96 = vcmask 0
      %97 = vst.msk [vmem:[#allocation8] sm:$0x1] %vm96, %v95
    $region25: #{tpu_custom_call.1} parent=1 // pred_fallthru
      _
    %p98 = scmp.ne.s32.totalorder 0, 0
    // Predicated region
    $region26: #{tpu_custom_call.1} parent=1 // pred_check
      %p99 = pneg %p98
    $region27: #{tpu_custom_call.1} parent=1 // pred_check_branch
      %101 = sbr.rel (%p99) target = $region29
    $region28: #{tpu_custom_call.1} parent=1 // pred_region
      %102 = vst [vmem:[#allocation2] sm:$0x1] 0.0
      %v103 = vld [vmem:[#allocation3] sm:$0xff]
      %v104 = vld [vmem:[#allocation6] sm:$0xff]
      %v105 = vmax.f32 %v103, 1e-07
      %v106 = vmin.f32 %v105, 0.9999999
      %v107 = vlog2.pop %v106
      %v108 = vmul.f32 %v107, 0.6931472
      %v109 = vmul.f32 %v104, %v108
      %v110 = vsub.f32 1.0, %v104
      %v111 = vsub.f32 1.0, %v106
      %v112 = vlog2.pop %v111
      %v113 = vmul.f32 %v112, 0.6931472
      %v114 = vmul.f32 %v110, %v113
      %v115 = vadd.f32 %v109, %v114
      %v116 = vsub.f32 0.0, %v115
      %v117 = vld [vmem:[#allocation2] sm:$0x1]
      %v118 = vrot.slane %v116, 4
      %v119 = vadd.f32 %v116, %v118
      %v120 = vrot.slane %v119, 2
      %v121 = vadd.f32 %v119, %v120
      %v122 = vrot.slane %v121, 1
      %v123 = vadd.f32 %v121, %v122
      %v124 = vadd.f32 %v117, %v123
      %125 = vst [vmem:[#allocation2] sm:$0x1] %v124
      %v126 = vld [vmem:[%s2] sm:$0x1]
      %v127 = vld [vmem:[#allocation2] sm:$0x1]
      %v128 = vmul.f32 %v126, %v127
      %vm129 = vcmask 1040384
      %v130 = vsel %vm129, %v128, 0.0
      %131 = vadd.xlane.f32.xlu0 %v130
      %v132 = vpop.xlane.xlu0 %131
      %v133 = vrot.slane %v132, 4
      %v134 = vadd.f32 %v132, %v133
      %v135 = vrot.slane %v134, 2
      %v136 = vadd.f32 %v134, %v135
      %v137 = vrot.slane %v136, 1
      %v138 = vadd.f32 %v136, %v137
      %s139 = vtos %v138
      %v140 = vstv %s139
      %vm141 = vcmask 0
      %142 = vst.msk [vmem:[#allocation8] sm:$0x1] %vm141, %v140
    $region29: #{tpu_custom_call.1} parent=1 // pred_fallthru
      _
    // Predicated region
    $region30: #{tpu_custom_call.1} parent=1 // pred_check
      _
    $region31: #{tpu_custom_call.1} parent=1 // pred_check_branch
      %144 = sbr.rel (0) target = $region33
    $region32: #{tpu_custom_call.1} parent=1 // pred_region
      %s146 = ssub.s32 16, 16
      %147 = vsyncadd [#allocation5], %s146
      %s149 = sshll.u32 [#allocation8], 4
      %s150 = int_to_ptr.vmem [resolvable:$true] %s149
      %152 = dma.vmem_to_hbm [thread:$0]  %s150, 16, %s3, [#allocation5]
    $region33: #{tpu_custom_call.1} parent=1 // pred_fallthru
      _
    // Predicated region
    $region34: #{tpu_custom_call.1} parent=1 // pred_check
      _
    $region35: #{tpu_custom_call.1} parent=1 // pred_check_branch
      %154 = sbr.rel (0) target = $region37
    $region36: #{tpu_custom_call.1} parent=1 // pred_region
      %155 = dma.done [#allocation5], 16
    $region37: #{tpu_custom_call.1} parent=1 // pred_fallthru
      _
    %156 = vsyncpa [#allocation4], 1
    %157 = vsyncpa [#allocation7], 1
    %158 = vsyncpa [#allocation5], 1

</llo_original>
